<compile_context>
chip_gen: v5e
topology: v5e:2x2
jax: 0.10.0
libtpu: 0.0.40
codegen_flags: <defaults>
</compile_context>

<pallas_src>
import functools
from typing import NamedTuple

import jax
import jax.numpy as jnp
from jax.experimental import pallas as pl
from jax.experimental.pallas import tpu as pltpu


def _round_up(x, m):
    return ((x + m - 1) // m) * m


# ----------------------------------------------------------------------------
# Kernel
# ----------------------------------------------------------------------------
def _gated_attn_kernel(x_ref, wab_ref, bab_ref, wc_ref, bc_ref, A_ref, *,
                       D, reduce_c1):
    x = x_ref[...]                                                # (tile_n, L)
    # One fused MXU dot for both branches: (tile_n, L) @ (L, 2D) -> f32 acc.
    ab = jnp.dot(x, wab_ref[...], preferred_element_type=jnp.float32)
    ab = ab + bab_ref[...]                                        # f32
    a = jnp.tanh(ab[:, :D])                                       # (tile_n, D)
    b = jax.nn.sigmoid(ab[:, D:])                                 # (tile_n, D)
    gated = a * b                                                 # f32

    if reduce_c1:
        # n_classes == 1: a (D,1) MXU dot would use one result lane; use the
        # otherwise-idle VPU/XLU path: elementwise mul + lane reduction.
        A = jnp.sum(gated * wc_ref[...], axis=-1, keepdims=True) + bc_ref[...]
    else:
        A = jnp.dot(gated, wc_ref[...],
                    preferred_element_type=jnp.float32) + bc_ref[...]
    A_ref[...] = A.astype(A_ref.dtype)                            # (tile_n, C)


# ----------------------------------------------------------------------------
# One-time parameter preparation (hoisted out of the per-call wrapper)
# ----------------------------------------------------------------------------
class PreparedParams(NamedTuple):
    wab: jax.Array        # (L, 2*Dp) fused Wa|Wb, MXU dtype (bf16 by default)
    bab: jax.Array        # (1, 2*Dp) fused ba|bb, f32
    wc: jax.Array         # (1, Dp) if n_classes == 1 else (Dp, C), f32
    bc: jax.Array         # (1, C), f32
    d_pad: int            # lane-aligned D
    n_classes: int
    reduce_c1: bool


def prepare_params(params, *, mxu_dtype=jnp.bfloat16):
    """Fuse / pad / cast the Linear weights once (not per forward call)."""
    wa, ba, wb, bb, wc, bc = params
    L, D = wa.shape
    C = wc.shape[1]

    # Lane-align the a/b split: padded columns give tanh(0)=0 -> gated col = 0,
    # and the padded Wc rows are 0, so results are bit-identical in effect.
    Dp = max(128, _round_up(D, 128))
    if Dp != D:
        colpad = ((0, 0), (0, Dp - D))
        wa = jnp.pad(wa, colpad)
        wb = jnp.pad(wb, colpad)
        ba = jnp.pad(ba, colpad)
        bb = jnp.pad(bb, colpad)
        wc = jnp.pad(wc, ((0, Dp - D), (0, 0)))

    wab = jnp.concatenate([wa, wb], axis=1).astype(mxu_dtype)     # (L, 2*Dp)
    bab = jnp.concatenate([ba, bb], axis=1).astype(jnp.float32)   # (1, 2*Dp)
    reduce_c1 = (C == 1)
    wc_arg = (wc.T if reduce_c1 else wc).astype(jnp.float32)
    bc_arg = bc.astype(jnp.float32)
    return PreparedParams(wab, bab, wc_arg, bc_arg, Dp, C, reduce_c1)


# ----------------------------------------------------------------------------
# Wrapper
# ----------------------------------------------------------------------------
def _vmem_capacity_bytes():
    try:
        return int(pltpu.get_tpu_info().vmem_capacity_bytes)
    except Exception:
        return 64 * 2**20          # conservative: v7x per-TensorCore VMEM


def _select_tile_n(N, max_tile):
    if N < 256:
        return N                   # tiny bag: one block, one grid step
    # >= 2 grid steps so both v7x TensorCores get work (and step overhead is
    # amortized); mid-size bags split in half, large bags use max_tile rows.
    half = _round_up(-(-N // 2), 128)
    return min(max_tile, max(128, half))


def attn_net_gated(x, prepared: PreparedParams, *, tile_n=None):
    """Pallas implementation of Attn_Net_Gated.forward. Returns (A, x)."""
    N, L = x.shape
    Dp, C = prepared.d_pad, prepared.n_classes
    mxu_dtype = prepared.wab.dtype

    vmem_cap = _vmem_capacity_bytes()
    # v7x (64 MiB VMEM/TC) -> cap tiles at 1024 rows; v5e/v6e (128 MiB) -> 2048.
    max_tile = 1024 if vmem_cap <= 96 * 2**20 else 2048

    if tile_n is None:
        tile_n = _select_tile_n(N, max_tile)
    tile_n = min(int(tile_n), N)
    if tile_n < N:
        # 16-row granularity: bf16 packs 2 rows per sublane; auto-selected
        # tiles are already 128-row aligned for full MXU passes.
        tile_n = max(16, (tile_n // 16) * 16)
        tile_n = min(tile_n, N)

    # Stream x in the MXU dtype. If x is already bf16 there is no copy; an
    # f32->bf16 cast may fuse into the pallas_call operand (allow_input_fusion)
    # when the caller jits this wrapper.
    x_in = x if x.dtype == mxu_dtype else x.astype(mxu_dtype)

    # No row padding: grid covers N with a masked partial boundary block.
    grid = (pl.cdiv(N, tile_n),)

    # Rough VMEM budget (double-buffered x/out tiles + resident weights).
    est = (2 * tile_n * L * x_in.dtype.itemsize           # x tiles
           + 2 * L * 2 * Dp * prepared.wab.dtype.itemsize  # fused weight
           + 3 * tile_n * 2 * Dp * 4                       # f32 temporaries
           + 2 * tile_n * C * 4                            # output tiles
           + 2 * (2 * Dp + Dp * C + C) * 4)                # biases + Wc
    vmem_limit = int(min(0.6 * vmem_cap, max(32 * 2**20, 2 * est)))

    kernel = functools.partial(_gated_attn_kernel, D=Dp,
                               reduce_c1=prepared.reduce_c1)

    A = pl.pallas_call(
        kernel,
        out_shape=jax.ShapeDtypeStruct((N, C), jnp.float32),
        grid_spec=pltpu.PrefetchScalarGridSpec(
            num_scalar_prefetch=0,
            grid=grid,
            in_specs=[
                pl.BlockSpec((tile_n, L), lambda i: (i, 0)),       # x (streamed)
                pl.BlockSpec((L, 2 * Dp), lambda i: (0, 0)),       # Wa|Wb fused
                pl.BlockSpec((1, 2 * Dp), lambda i: (0, 0)),       # ba|bb fused
                pl.BlockSpec(prepared.wc.shape, lambda i: (0, 0)),  # Wc
                pl.BlockSpec((1, C), lambda i: (0, 0)),            # bc
            ],
            out_specs=pl.BlockSpec((tile_n, C), lambda i: (i, 0)),
        ),
        compiler_params=pltpu.CompilerParams(
            dimension_semantics=("parallel",),
            vmem_limit_bytes=vmem_limit,
            allow_input_fusion=[True, False, False, False, False],
        ),
    )(x_in, prepared.wab, prepared.bab, prepared.wc, prepared.bc)

    # Module returns the (unmodified) input as the second output.
    return A, x


# ----------------------------------------------------------------------------
# Test harness
# ----------------------------------------------------------------------------
def init_params(key, L, D, n_classes):
    """Deterministic synthetic parameters (nn.Linear weights, stored (in, out))."""
    ks = jax.random.split(key, 6)
    wa = 0.05 * jax.random.normal(ks[0], (L, D), jnp.float32)
    ba = 0.05 * jax.random.normal(ks[1], (1, D), jnp.float32)
    wb = 0.05 * jax.random.normal(ks[2], (L, D), jnp.float32)
    bb = 0.05 * jax.random.normal(ks[3], (1, D), jnp.float32)
    wc = 0.05 * jax.random.normal(ks[4], (D, n_classes), jnp.float32)
    bc = 0.05 * jax.random.normal(ks[5], (1, n_classes), jnp.float32)
    return wa, ba, wb, bb, wc, bc


def reference(x, params):
    wa, ba, wb, bb, wc, bc = params
    a = jnp.tanh(x @ wa + ba)
    b = jax.nn.sigmoid(x @ wb + bb)
    return (a * b) @ wc + bc


if __name__ == "__main__":
    key = jax.random.PRNGKey(0)
    kx1, kp1, kx2, kp2, kx3 = jax.random.split(key, 5)

    # --- Case 1: default MIL head (n_classes=1), bf16-MXU default path ------
    N, L, D, C = 16, 32, 16, 1
    x = jax.random.normal(kx1, (N, L), jnp.float32)
    params = init_params(kp1, L, D, C)
    prep_bf16 = prepare_params(params)                    # bf16 MXU (default)
    A, x_out = attn_net_gated(x, prep_bf16)
    A = jax.block_until_ready(A)
    A_ref = reference(x, params)
    assert A.shape == (N, C) and x_out.shape == (N, L)
    assert jnp.allclose(A, A_ref, atol=3e-2, rtol=3e-2), "bf16 path mismatch"

    # --- Case 1b: exact f32 MXU path ----------------------------------------
    prep_f32 = prepare_params(params, mxu_dtype=jnp.float32)
    A32, _ = attn_net_gated(x, prep_f32)
    A32 = jax.block_until_ready(A32)
    assert jnp.allclose(A32, A_ref, atol=1e-5, rtol=1e-5), "f32 path mismatch"

    # --- Case 2: N % tile_n != 0 (masked boundary block, no padding copies),
    #             n_classes > 1 (MXU tail dot), f32 for a tight check --------
    N2, C2 = 24, 3
    x2 = jax.random.normal(kx2, (N2, L), jnp.float32)
    params2 = init_params(kp2, L, D, C2)
    prep2 = prepare_params(params2, mxu_dtype=jnp.float32)
    A2, _ = attn_net_gated(x2, prep2, tile_n=16)          # grid=(2,), tail block partial
    A2 = jax.block_until_ready(A2)
    A2_ref = reference(x2, params2)
    assert A2.shape == (N2, C2)
    assert jnp.allclose(A2, A2_ref, atol=1e-5, rtol=1e-5), "partial-tile mismatch"

    # --- Case 3: auto tile split (>=2 grid steps) + partial boundary, bf16 --
    N3 = 300
    x3 = jax.random.normal(kx3, (N3, L), jnp.float32)
    A3, _ = attn_net_gated(x3, prep_bf16)                 # auto: tile_n=256, grid=(2,)
    A3 = jax.block_until_ready(A3)
    A3_ref = reference(x3, params)
    assert A3.shape == (N3, C)
    assert jnp.allclose(A3, A3_ref, atol=3e-2, rtol=3e-2), "auto-tile mismatch"

    # TODO(synk): dropout=True branch (nn.Dropout(0.25) in train mode) not
    # implemented; the default module config (dropout=False, eval forward) is covered.
    print("KERNEL_OK")
</pallas_src>

<mosaic_0001>
module attributes {stable_mosaic.version = 11 : i64} {
  func.func @_gated_attn_kernel(%arg0: i32, %arg1: memref<16x32xbf16, #tpu.memory_space<vmem>>, %arg2: memref<32x256xbf16, #tpu.memory_space<vmem>>, %arg3: memref<1x256xf32, #tpu.memory_space<vmem>>, %arg4: memref<1x128xf32, #tpu.memory_space<vmem>>, %arg5: memref<1x1xf32, #tpu.memory_space<vmem>>, %arg6: memref<16x1xf32, #tpu.memory_space<vmem>>) attributes {dimension_semantics = [#tpu.dimension_semantics<parallel>], iteration_bounds = array<i64: 1>, scalar_prefetch = 0 : i64, scratch_operands = 0 : i64, tpu.core_type = #tpu.core_type<tc>, window_params = [{transform_indices = @transform_0, window_bounds = array<i64: 16, 32>}, {pipeline_mode = #tpu.pipeline_mode<synchronous>, transform_indices = @transform_1, window_bounds = array<i64: 32, 256>}, {pipeline_mode = #tpu.pipeline_mode<synchronous>, transform_indices = @transform_2, window_bounds = array<i64: 1, 256>}, {pipeline_mode = #tpu.pipeline_mode<synchronous>, transform_indices = @transform_3, window_bounds = array<i64: 1, 128>}, {pipeline_mode = #tpu.pipeline_mode<synchronous>, transform_indices = @transform_4, window_bounds = array<i64: 1, 1>}, {transform_indices = @transform_5, window_bounds = array<i64: 16, 1>}]} {
    %c0 = arith.constant 0 : index
    %c0_0 = arith.constant 0 : index
    %0 = vector.load %arg1[%c0, %c0_0] : memref<16x32xbf16, #tpu.memory_space<vmem>>, vector<16x32xbf16>
    %c0_1 = arith.constant 0 : index
    %c0_2 = arith.constant 0 : index
    %1 = vector.load %arg2[%c0_1, %c0_2] : memref<32x256xbf16, #tpu.memory_space<vmem>>, vector<32x256xbf16>
    %cst = arith.constant dense<0.000000e+00> : vector<16x256xf32>
    %2 = tpu.matmul %0, %1, %cst {dimension_numbers = #tpu.dot_dimension_numbers<[1], [0], [0], [1], [0, 0, 1, 1], [], []>} : vector<16x32xbf16>, vector<32x256xbf16>, vector<16x256xf32> -> vector<16x256xf32>
    %c0_3 = arith.constant 0 : index
    %c0_4 = arith.constant 0 : index
    %3 = vector.load %arg3[%c0_3, %c0_4] : memref<1x256xf32, #tpu.memory_space<vmem>>, vector<1x256xf32>
    %4 = vector.broadcast %3 : vector<1x256xf32> to vector<16x256xf32>
    %5 = arith.addf %2, %4 : vector<16x256xf32>
    %6 = vector.extract_strided_slice %5 {offsets = [0, 0], sizes = [16, 128], strides = [1, 1]} : vector<16x256xf32> to vector<16x128xf32>
    %7 = math.tanh %6 : vector<16x128xf32>
    %8 = vector.extract_strided_slice %5 {offsets = [0, 128], sizes = [16, 128], strides = [1, 1]} : vector<16x256xf32> to vector<16x128xf32>
    %9 = arith.negf %8 : vector<16x128xf32>
    %10 = math.exp %9 : vector<16x128xf32>
    %cst_5 = arith.constant 1.000000e+00 : f32
    %11 = vector.broadcast %cst_5 : f32 to vector<16x128xf32>
    %12 = arith.addf %11, %10 : vector<16x128xf32>
    %13 = arith.divf %11, %12 : vector<16x128xf32>
    %14 = arith.mulf %7, %13 : vector<16x128xf32>
    %c0_6 = arith.constant 0 : index
    %c0_7 = arith.constant 0 : index
    %15 = vector.load %arg4[%c0_6, %c0_7] : memref<1x128xf32, #tpu.memory_space<vmem>>, vector<1x128xf32>
    %16 = vector.broadcast %15 : vector<1x128xf32> to vector<16x128xf32>
    %17 = arith.mulf %14, %16 : vector<16x128xf32>
    %cst_8 = arith.constant dense<0.000000e+00> : vector<16xf32>
    %18 = vector.multi_reduction <add>, %17, %cst_8 [1] : vector<16x128xf32> to vector<16xf32>
    %19 = vector.shape_cast %18 : vector<16xf32> to vector<16x1xf32>
    %c0_9 = arith.constant 0 : index
    %c0_10 = arith.constant 0 : index
    %20 = vector.load %arg5[%c0_9, %c0_10] : memref<1x1xf32, #tpu.memory_space<vmem>>, vector<1x1xf32>
    %21 = vector.broadcast %20 : vector<1x1xf32> to vector<16x1xf32>
    %22 = arith.addf %19, %21 : vector<16x1xf32>
    %c0_11 = arith.constant 0 : index
    %c0_12 = arith.constant 0 : index
    %23 = vector.load %arg6[%c0_11, %c0_12] : memref<16x1xf32, #tpu.memory_space<vmem>>, vector<16x1xf32>
    tpu.vector_store %arg6[%c0_11, %c0_12], %22 {strides = array<i32>} : memref<16x1xf32, #tpu.memory_space<vmem>>, vector<16x1xf32>,
    return
  }
  func.func @transform_0(%arg0: i32) -> (i32, i32) {
    %c0_i32 = arith.constant 0 : i32
    %c0_i32_0 = arith.constant 0 : i32
    return %arg0, %c0_i32 : i32, i32
  }
  func.func @transform_1(%arg0: i32) -> (i32, i32) {
    %c0_i32 = arith.constant 0 : i32
    %c0_i32_0 = arith.constant 0 : i32
    %c0_i32_1 = arith.constant 0 : i32
    return %c0_i32, %c0_i32_0 : i32, i32
  }
  func.func @transform_2(%arg0: i32) -> (i32, i32) {
    %c0_i32 = arith.constant 0 : i32
    %c0_i32_0 = arith.constant 0 : i32
    %c0_i32_1 = arith.constant 0 : i32
    return %c0_i32, %c0_i32_0 : i32, i32
  }
  func.func @transform_3(%arg0: i32) -> (i32, i32) {
    %c0_i32 = arith.constant 0 : i32
    %c0_i32_0 = arith.constant 0 : i32
    %c0_i32_1 = arith.constant 0 : i32
    return %c0_i32, %c0_i32_0 : i32, i32
  }
  func.func @transform_4(%arg0: i32) -> (i32, i32) {
    %c0_i32 = arith.constant 0 : i32
    %c0_i32_0 = arith.constant 0 : i32
    %c0_i32_1 = arith.constant 0 : i32
    return %c0_i32, %c0_i32_0 : i32, i32
  }
  func.func @transform_5(%arg0: i32) -> (i32, i32) {
    %c0_i32 = arith.constant 0 : i32
    %c0_i32_0 = arith.constant 0 : i32
    return %arg0, %c0_i32 : i32, i32
  }
}

</mosaic_0001>

<llo_original>
// kernel: tpu_custom_call.1
$region0: #{tpu_custom_call.1}
  #allocation0 [shape = 'u32[]', space=smem, size = 0x4, offset = 0x4, fixed_abs, tag = 'smem constant byte address 0x4 - core index']
  #allocation1 [shape = 'u32[72,128]{1,0:T(1,128)}', space=vmem, size = 0x9000, scoped, tag = 'internal scratch']
  #allocation2 [shape = 'f32[1,1]{1,0:T(1,128)S(1)}', space=vmem, size = 0x200, scoped, tag = 'scoped memory for tpu_custom_call.1']
  %s0 = inlined_call_operand.hbm [shape: bf16[16,32], index: 0, kind: input, shape index: {}]
  %s1 = inlined_call_operand.hbm [shape: bf16[32,256], index: 1, kind: input, shape index: {}]
  %s2 = inlined_call_operand.vmem [shape: f32[1,256], index: 2, kind: input, shape index: {}]
  %s3 = inlined_call_operand.vmem [shape: f32[1,128], index: 3, kind: input, shape index: {}]
  %s4 = inlined_call_operand.<no memory space> [shape: f32[1,1], index: 4, kind: input, shape index: {}]
  %s5 = inlined_call_operand.vmem [shape: f32[16,1], index: 5, kind: output, shape index: {}]
  %s6 = sld [smem:[#allocation0]]
  $region38: #{tpu_custom_call.1} parent=0
    _
  %s8 = ssub.s32 1, %s6
  %s9 = scalar_select 0, %s8, %s6
  %v10 = vstv %s4
  %11 = vst [vmem:[#allocation2] sm:$0x1] %v10
  $region1: #{tpu_custom_call.1} parent=0
    #allocation3 [shape = 'u8[4096]{0}', space=vmem, size = 0x1000, scoped, tag = 'input window, operand 0, single buffered']
    #allocation4 [shape = 's32[1]{0}', space=sflag, size = 0x4, scoped, tag = 'scoped memory for tpu_custom_call.1']
    #allocation5 [shape = 'u8[16384]{0}', space=vmem, size = 0x4000, scoped, tag = 'input window, operand 1, single buffered']
    #allocation6 [shape = 's32[1]{0}', space=sflag, size = 0x4, scoped, tag = 'scoped memory for tpu_custom_call.1']
    %12 = vsyncpa [#allocation4], 0
    %13 = vsyncpa [#allocation6], 0
    // Predicated region
    $region2: #{tpu_custom_call.1} parent=1 // pred_check
      _
    $region3: #{tpu_custom_call.1} parent=1 // pred_check_branch
      %15 = sbr.rel (0) target = $region5
    $region4: #{tpu_custom_call.1} parent=1 // pred_region
      %17 = vsyncadd [#allocation4], 0
      %s18 = sshll.u32 %s0, 4
      %s19 = int_to_ptr.hbm [resolvable:$true] %s18
      %s20 = sshll.u32 [#allocation3], 4
      %s21 = int_to_ptr.vmem [resolvable:$true] %s20
      %26 = dma.hbm_to_vmem [thread:$0]  %s19, 128, %s21, [#allocation4], 64, 64, 4
    $region5: #{tpu_custom_call.1} parent=1 // pred_fallthru
      _
    // Predicated region
    $region6: #{tpu_custom_call.1} parent=1 // pred_check
      _
    $region7: #{tpu_custom_call.1} parent=1 // pred_check_branch
      %28 = sbr.rel (0) target = $region9
    $region8: #{tpu_custom_call.1} parent=1 // pred_region
      %30 = vsyncadd [#allocation6], 0
      %s31 = sshll.u32 %s1, 4
      %s32 = int_to_ptr.hbm [resolvable:$true] %s31
      %s33 = sshll.u32 [#allocation5], 4
      %s34 = int_to_ptr.vmem [resolvable:$true] %s33
      %39 = dma.hbm_to_vmem [thread:$0]  %s32, 512, %s34, [#allocation6], 128, 128, 8
    $region9: #{tpu_custom_call.1} parent=1 // pred_fallthru
      _
    // Predicated region
    $region10: #{tpu_custom_call.1} parent=1 // pred_check
      _
    $region11: #{tpu_custom_call.1} parent=1 // pred_check_branch
      %41 = sbr.rel (0) target = $region13
    $region12: #{tpu_custom_call.1} parent=1 // pred_region
      _
    $region13: #{tpu_custom_call.1} parent=1 // pred_fallthru
      _
    // Predicated region
    $region14: #{tpu_custom_call.1} parent=1 // pred_check
      _
    $region15: #{tpu_custom_call.1} parent=1 // pred_check_branch
      %43 = sbr.rel (0) target = $region17
    $region16: #{tpu_custom_call.1} parent=1 // pred_region
      _
    $region17: #{tpu_custom_call.1} parent=1 // pred_fallthru
      _
    // Predicated region
    $region18: #{tpu_custom_call.1} parent=1 // pred_check
      _
    $region19: #{tpu_custom_call.1} parent=1 // pred_check_branch
      %45 = sbr.rel (0) target = $region21
    $region20: #{tpu_custom_call.1} parent=1 // pred_region
      _
    $region21: #{tpu_custom_call.1} parent=1 // pred_fallthru
      _
    // Predicated region
    $region22: #{tpu_custom_call.1} parent=1 // pred_check
      _
    $region23: #{tpu_custom_call.1} parent=1 // pred_check_branch
      %47 = sbr.rel (0) target = $region25
    $region24: #{tpu_custom_call.1} parent=1 // pred_region
      %49 = dma.done [#allocation4], 128
    $region25: #{tpu_custom_call.1} parent=1 // pred_fallthru
      _
    // Predicated region
    $region26: #{tpu_custom_call.1} parent=1 // pred_check
      _
    $region27: #{tpu_custom_call.1} parent=1 // pred_check_branch
      %51 = sbr.rel (0) target = $region29
    $region28: #{tpu_custom_call.1} parent=1 // pred_region
      %53 = dma.done [#allocation6], 512
    $region29: #{tpu_custom_call.1} parent=1 // pred_fallthru
      _
    %v55 = vld [vmem:[#allocation3] sm:$0xf]
    %v56 = vld [vmem:[#allocation3 + $0x4] sm:$0xf]
    %v57 = vld [vmem:[#allocation5] sm:$0xff]
    %v58 = vld [vmem:[#allocation5 + $0x8] sm:$0xff]
    %v59 = vld [vmem:[#allocation5 + $0x10] sm:$0xff]
    %v60 = vld [vmem:[#allocation5 + $0x18] sm:$0xff]
    %v61 = vld [vmem:[%s2] sm:$0x3]
    %v63 = vperm.slane %v61, 0
    %v64 = vperm.slane %v61, 1
    %v69 = vunpack.c.l.b16 %v55
    %v70 = vunpack.c.l.b16 %v56
    %v71 = vpack.c.b16 %v70, %v69
    %v76 = vunpack.c.l.b16 %v57
    %v77 = vunpack.c.h.b16 %v57
    %v78 = vunpack.c.l.b16 %v58
    %v79 = vunpack.c.h.b16 %v58
    %v80 = vunpack.c.l.b16 %v59
    %v81 = vunpack.c.h.b16 %v59
    %v82 = vunpack.c.l.b16 %v60
    %v83 = vunpack.c.h.b16 %v60
    %v84 = vpack.c.b16 %v78, %v76
    %v85 = vpack.c.b16 %v79, %v77
    %v86 = vpack.c.b16 %v82, %v80
    %v87 = vpack.c.b16 %v83, %v81
    %vm92 = vcmask 261120
    %v94 = vsel %vm92, %v71, 0
    %96 = vmatpush.bf16.msra.mxu0 0
    %97 = vmatpush.bf16.msra.mxu0 0
    %98 = vmatpush.bf16.msra.mxu0 0
    %99 = vmatpush.bf16.msra.mxu0 0
    %100 = vmatpush.bf16.msra.mxu0 0
    %101 = vmatpush.bf16.msra.mxu0 0
    %102 = vmatpush.bf16.msra.mxu0 %v86
    %103 = vmatpush.bf16.msra.mxu0 %v84
    %104 = vmatmul.bf16.gmra.mxu0 %v94
    %v105 = vpop.f32.mrf.mxu0
    %v106 = vadd.f32 %v63, %v105
    %v107 = vpop.f32.mrf.mxu0
    %v108 = vadd.f32 %v63, %v107
    %109 = vdwg.mxu0
    %110 = vmatpush.bf16.msra.mxu0 0
    %111 = vmatpush.bf16.msra.mxu0 0
    %112 = vmatpush.bf16.msra.mxu0 0
    %113 = vmatpush.bf16.msra.mxu0 0
    %114 = vmatpush.bf16.msra.mxu0 0
    %115 = vmatpush.bf16.msra.mxu0 0
    %116 = vmatpush.bf16.msra.mxu0 %v87
    %117 = vmatpush.bf16.msra.mxu0 %v85
    %118 = vmatmul.bf16.gmra.mxu0 %v94
    %v119 = vpop.f32.mrf.mxu0
    %v120 = vadd.f32 %v64, %v119
    %v121 = vpop.f32.mrf.mxu0
    %v122 = vadd.f32 %v64, %v121
    %123 = vdwg.mxu0
    %v124 = vtanh.pop %v106
    %v125 = vtanh.pop %v108
    %v126 = vxor.u32 %v120, 2147483648
    %v127 = vxor.u32 %v122, 2147483648
    %v128 = vmul.f32 %v126, 1.442695
    %v129 = vpow.pop %v128
    %v130 = vmul.f32 %v127, 1.442695
    %v131 = vpow.pop %v130
    %v132 = vadd.f32 %v129, 1.0
    %v133 = vadd.f32 %v131, 1.0
    %v134 = vrcp.pop %v132
    %v135 = vmul.f32 %v132, %v134
    %v136 = vsub.f32 1.0, %v135
    %v137 = vmul.f32 %v134, %v136
    %v138 = vadd.f32 %v134, %v137
    %vm139 = vweird.f32 %v132
    %vm140 = vweird.f32 %v134
    %vm141 = vmor %vm139, %vm140
    %v142 = vsel %vm141, %v134, %v138
    %v143 = vand.u32 2147483647, %v132
    %vm144 = vcmp.eq.f32.partialorder %v143, 8.507059e+37
    %v145 = vand.u32 %v132, 2147483648
    %v146 = vor.u32 1.1754944e-38, %v145
    %v147 = vsel %vm144, %v146, %v142
    %v148 = vmul.f32 1.0, %v147
    %v149 = vrcp.pop %v133
    %v150 = vmul.f32 %v133, %v149
    %v151 = vsub.f32 1.0, %v150
    %v152 = vmul.f32 %v149, %v151
    %v153 = vadd.f32 %v149, %v152
    %vm154 = vweird.f32 %v133
    %vm155 = vweird.f32 %v149
    %vm156 = vmor %vm154, %vm155
    %v157 = vsel %vm156, %v149, %v153
    %v158 = vand.u32 2147483647, %v133
    %vm159 = vcmp.eq.f32.partialorder %v158, 8.507059e+37
    %v160 = vand.u32 %v133, 2147483648
    %v161 = vor.u32 1.1754944e-38, %v160
    %v162 = vsel %vm159, %v161, %v157
    %v163 = vmul.f32 1.0, %v162
    %v164 = vmul.f32 %v124, %v148
    %v165 = vmul.f32 %v125, %v163
    %v166 = vld [vmem:[%s3] sm:$0x1]
    %v168 = vperm.slane %v166, 0
    %v170 = vmul.f32 %v164, %v168
    %v171 = vmul.f32 %v165, %v168
    %172 = vadd.xlane.f32.xlu0 %v170
    %v173 = vpop.xlane.xlu0 %172
    %174 = vadd.xlane.f32.xlu0 %v171
    %v175 = vpop.xlane.xlu0 %174
    %v176 = vld [vmem:[#allocation2] sm:$0x1]
    %v178 = vperm.slane %v176, 0
    %v180 = vadd.f32 %v173, %v178
    %v181 = vadd.f32 %v175, %v178
    %vm182 = vcmask 7168
    %183 = vst.msk [vmem:[%s5] sm:$0xff] %vm182, %v180
    %184 = vst.msk [vmem:[%s5 + $0x8] sm:$0xff] %vm182, %v181
    // Predicated region
    $region30: #{tpu_custom_call.1} parent=1 // pred_check
      _
    $region31: #{tpu_custom_call.1} parent=1 // pred_check_branch
      %186 = sbr.rel (0) target = $region33
    $region32: #{tpu_custom_call.1} parent=1 // pred_region
      _
    $region33: #{tpu_custom_call.1} parent=1 // pred_fallthru
      _
    // Predicated region
    $region34: #{tpu_custom_call.1} parent=1 // pred_check
      _
    $region35: #{tpu_custom_call.1} parent=1 // pred_check_branch
      %188 = sbr.rel (0) target = $region37
    $region36: #{tpu_custom_call.1} parent=1 // pred_region
      _
    $region37: #{tpu_custom_call.1} parent=1 // pred_fallthru
      _
    %189 = vsyncpa [#allocation4], 1
    %190 = vsyncpa [#allocation6], 1

</llo_original>
